<compile_context>
chip_gen: v7x
topology: tpu7x:2x2x1
jax: 0.10.0
libtpu: 0.0.40
codegen_flags: <defaults>
</compile_context>

<pallas_src>
import functools
import numpy as np
import jax
import jax.numpy as jnp
from jax import lax
from jax.experimental import pallas as pl
from jax.experimental.pallas import tpu as pltpu


# --------------------------------------------------------------------------
# kernel
# --------------------------------------------------------------------------
def _lipschitz_kernel(img_ref, emb_ref, vc_ref, o_ref,
                      cross_ref, sqlr_ref, sqpos_ref, sqhr_ref,
                      *, N, lip, squared):
    k = pl.program_id(0)
    nk = pl.num_programs(0)

    B = img_ref.shape[0]
    tk = img_ref.shape[2]

    # ---------------- init accumulators on the first Din tile ----------------
    @pl.when(k == 0)
    def _init():
        cross_ref[...] = jnp.zeros_like(cross_ref)
        sqlr_ref[...] = jnp.zeros_like(sqlr_ref)
        sqpos_ref[...] = jnp.zeros_like(sqpos_ref)
        sqhr_ref[...] = jnp.zeros_like(sqhr_ref)

    # ---------------- streamed accumulation over the Din tile ----------------
    hr = img_ref[:, 0, :]                                   # (B, tk)
    ones_row = jnp.ones((1, tk), dtype=jnp.float32)
    # lane-dense (1, B) row of HR squared norms via a ones-row matmul
    sqhr_ref[...] += lax.dot_general(
        ones_row, hr * hr, (((1,), (1,)), ((), ())),
        preferred_element_type=jnp.float32)

    for n in range(N):                                      # N is small & static
        lr = img_ref[:, n + 1, :]                           # (B, tk)
        # image Gram: rows = LR batch index, cols = HR batch index
        cross_ref[n] += lax.dot_general(
            lr, hr, (((1,), (1,)), ((), ())),
            preferred_element_type=jnp.float32)             # (B, B)
        sqlr_ref[n] += jnp.sum(lr * lr, axis=-1, keepdims=True)     # (B, 1)
        d = lr - hr                                         # exact paired diff
        sqpos_ref[n] += jnp.sum(d * d, axis=-1, keepdims=True)      # (B, 1)

    # ---------------- finalize on the last Din tile ----------------
    @pl.when(k == nk - 1)
    def _finalize():
        vc = vc_ref[...]                                    # (1, B)
        hr_e = emb_ref[:, 0, :]                             # (B, E)
        hr_n = hr_e * lax.rsqrt(jnp.sum(hr_e * hr_e, axis=-1, keepdims=True))
        sq_hr = sqhr_ref[...]                               # (1, B)

        row = lax.broadcasted_iota(jnp.int32, (B, B), 0)
        col = lax.broadcasted_iota(jnp.int32, (B, B), 1)
        diag = row == col
        offdiag_f = (row != col).astype(jnp.float32)

        pos_sum = jnp.float32(0.0)
        neg_sum = jnp.float32(0.0)
        for n in range(N):
            lr_e = emb_ref[:, n + 1, :]                     # (B, E)
            lr_n = lr_e * lax.rsqrt(jnp.sum(lr_e * lr_e, axis=-1, keepdims=True))
            cos = lax.dot_general(
                lr_n, hr_n, (((1,), (1,)), ((), ())),
                preferred_element_type=jnp.float32)         # (B, B)

            sq_lr = sqlr_ref[n]                             # (B, 1)
            sq_pos = sqpos_ref[n]                           # (B, 1) exact
            cross = cross_ref[n]                            # (B, B)

            # exact-equality gate (torch.equal) from the direct diff
            eq = sq_pos == 0.0                              # (B, 1)

            # --- positive pairs: cosine from the Gram diagonal, exact dist ---
            cos_pos = jnp.sum(jnp.where(diag, cos, 0.0), axis=-1,
                              keepdims=True)                # (B, 1)
            inv_dpos = lax.rsqrt(jnp.maximum(sq_pos, 1e-24))
            r_pos = (1.0 - cos_pos) * inv_dpos - lip
            t_pos = r_pos * r_pos if squared else jnp.maximum(r_pos, 0.0)
            pos_sum = pos_sum + jnp.sum(jnp.where(eq, 0.0, t_pos))

            # --- negative pairs: Gram-identity distance, guarded vs NaN/inf ---
            sq_cross = jnp.maximum(sq_lr + sq_hr - 2.0 * cross, 1e-24)
            inv_dx = lax.rsqrt(sq_cross)
            r_neg = (1.0 - cos) * inv_dx - lip
            t_neg = r_neg * r_neg if squared else jnp.maximum(r_neg, 0.0)
            pen = jnp.sum(t_neg * offdiag_f * vc, axis=-1, keepdims=True)
            neg_sum = neg_sum + jnp.sum(jnp.where(eq, 0.0, pen))

        denom = 1.0 / float(B * N)
        o_ref[0] = pos_sum * denom
        o_ref[1] = -neg_sum * denom


# --------------------------------------------------------------------------
# tiling plan / wrapper
# --------------------------------------------------------------------------
def _round_up(x, m):
    return ((x + m - 1) // m) * m


def _plan_tiles(B, M, Din, E):
    """Pick a Din tile and a VMEM budget that fit all chips (v5e/v6e/v7x)."""
    n = M - 1
    m_pad = max(_round_up(M, 8), 8)              # sublane padding of the M axis
    img_budget = 4 * 1024 * 1024                 # double-buffered image block
    tk_cap = img_budget // (2 * B * m_pad * 4)
    tk_cap = max(128, min(2048, (tk_cap // 128) * 128))

    if Din <= tk_cap:
        tk, din_pad = Din, Din                   # full-dim block (always legal)
    else:
        tk = None
        for cand in range(tk_cap, 127, -128):    # prefer a divisor of Din
            if Din % cand == 0:
                tk = cand
                break
        if tk is None:                           # fall back to zero-padding Din
            tk = tk_cap
        din_pad = _round_up(Din, tk)

    b_pad = _round_up(B, 8)
    img_bytes = 2 * B * m_pad * tk * 4
    emb_bytes = 2 * B * m_pad * _round_up(E, 128) * 4
    scr_bytes = (n * b_pad * _round_up(B, 128) * 4          # cross Gram
                 + 2 * n * b_pad * 128 * 4                   # sq_lr / sq_pos
                 + 8 * _round_up(B, 128) * 4)                # sq_hr
    need = img_bytes + emb_bytes + scr_bytes + (8 << 20)     # slack for temps
    vmem_limit = int(min(max(need, 32 << 20), 48 << 20))
    return tk, din_pad, vmem_limit


@functools.partial(jax.jit, static_argnames=("lip", "squared", "lip_negative"))
def _lipschitz_forward(inp, out, vcount, *, lip, squared, lip_negative):
    B, M = inp.shape[0], inp.shape[1]
    N = M - 1
    E = out.shape[-1]
    Din = 1
    for d in inp.shape[2:]:
        Din *= int(d)

    inp3 = inp.reshape(B, M, Din).astype(jnp.float32)        # free reshape
    out3 = out.astype(jnp.float32)
    vc = vcount.reshape(1, B).astype(jnp.float32)

    tk, din_pad, vmem_limit = _plan_tiles(B, M, Din, E)
    if din_pad != Din:
        # zero padding is neutral for every accumulated quantity
        inp3 = jnp.pad(inp3, ((0, 0), (0, 0), (0, din_pad - Din)))
    K = din_pad // tk

    kernel = functools.partial(_lipschitz_kernel, N=N, lip=float(lip),
                               squared=bool(squared))

    grid_spec = pltpu.PrefetchScalarGridSpec(
        num_scalar_prefetch=0,
        grid=(K,),
        in_specs=[
            pl.BlockSpec((B, M, tk), lambda k: (0, 0, k)),   # streamed images
            pl.BlockSpec((B, M, E), lambda k: (0, 0, 0)),    # resident embeds
            pl.BlockSpec((1, B), lambda k: (0, 0)),          # valid counts
        ],
        out_specs=pl.BlockSpec(memory_space=pltpu.MemorySpace.SMEM),
        scratch_shapes=[
            pltpu.VMEM((N, B, B), jnp.float32),              # cross Gram acc
            pltpu.VMEM((N, B, 1), jnp.float32),              # sq_lr acc
            pltpu.VMEM((N, B, 1), jnp.float32),              # sq_pos acc (exact)
            pltpu.VMEM((1, B), jnp.float32),                 # sq_hr acc
        ],
    )

    res = pl.pallas_call(
        kernel,
        out_shape=jax.ShapeDtypeStruct((2,), jnp.float32),
        grid_spec=grid_spec,
        compiler_params=pltpu.CompilerParams(
            dimension_semantics=("arbitrary",),
            vmem_limit_bytes=vmem_limit),
    )(inp3, out3, vc)

    pos, neg = res[0], res[1]
    if lip_negative:
        return pos + neg
    return pos


class LipschitzLossJAX:
    """JAX/Pallas port of Lipschitz_loss (forward value only)."""

    def __init__(self, embedding_size, num_classes, max_id_size, valid_step,
                 squared, lip, detach_HR, p=0.2, fp16=False, lip_negative=True):
        self.eps = 1e-10
        self.p = p                       # unused in forward
        self.detach_HR = detach_HR       # grad-only semantics; no forward effect
        self.lip = float(lip)
        self.embedding_size = embedding_size
        self.num_classes = num_classes
        self.squared = bool(squared)
        self.fp16 = fp16
        self.max_id_size = max_id_size
        self.valid_step = valid_step
        self.lip_negative = lip_negative
        self.memory_bank_HR = np.zeros((num_classes, max_id_size, embedding_size),
                                       dtype=np.float32)
        self.validness = np.zeros((num_classes, max_id_size), dtype=np.float32)

    def __call__(self, inp, out, labels):
        assert inp.shape[0] == labels.shape[0]
        B = inp.shape[0]

        labels_np = np.asarray(labels)
        hr_emb_host = np.asarray(out[:, 0, :], dtype=np.float32)   # small (B,E)

        # TODO(synk): data-dependent sequential scatter; kept as host glue.
        for b in range(B):
            lab = int(labels_np[b])
            min_idx = int(np.argmin(self.validness[lab]))
            self.memory_bank_HR[lab, min_idx] = hr_emb_host[b]
            self.validness[lab, min_idx] = self.valid_step
        self.validness = self.validness - 1.0

        vcount = np.array([(self.validness[int(labels_np[b])] > 0).sum()
                           for b in range(B)], dtype=np.float32)

        return _lipschitz_forward(jnp.asarray(inp), jnp.asarray(out),
                                  jnp.asarray(vcount),
                                  lip=self.lip, squared=self.squared,
                                  lip_negative=self.lip_negative)


# ------------------- pure-NumPy reference (PyTorch semantics) -------------------
def _reference_loss(inp, out, labels, validness_after, lip, squared, lip_negative):
    inp = np.asarray(inp, dtype=np.float64)
    out = np.asarray(out, dtype=np.float64)
    B, M = inp.shape[0], inp.shape[1]
    N = M - 1
    inp = inp.reshape(B, M, -1)
    pen_pos = np.zeros(B * N)
    pen_neg = np.zeros(B * N)
    idx = 0
    for b in range(B):
        for j in range(1, M):
            if not np.array_equal(inp[b, j], inp[b, 0]):
                lr = out[b, j] / np.linalg.norm(out[b, j])
                hr = out[b, 0] / np.linalg.norm(out[b, 0])
                inp_diff = np.sqrt(((inp[b, j] - inp[b, 0]) ** 2).sum())
                cos = (hr * lr).sum() / max(np.linalg.norm(hr) * np.linalg.norm(lr), 1e-8)
                r = (1.0 - cos) / inp_diff - lip
                pen_pos[idx] = r * r if squared else max(r, 0.0)
                s = 0.0
                for bn in range(B):
                    if bn != b:
                        cnt = float((validness_after[int(labels[bn])] > 0).sum())
                        inp_diff_n = np.sqrt(((inp[b, j] - inp[bn, 0]) ** 2).sum())
                        hrn = out[bn, 0] / np.linalg.norm(out[bn, 0])
                        cosn = (hrn * lr).sum() / max(np.linalg.norm(hrn) * np.linalg.norm(lr), 1e-8)
                        rn = (1.0 - cosn) / inp_diff_n - lip
                        t = rn * rn if squared else max(rn, 0.0)
                        s += cnt * t
                pen_neg[idx] = s
            idx += 1
    pos = pen_pos.mean()
    neg = -pen_neg.mean()
    return pos + neg if lip_negative else pos


if __name__ == "__main__":
    # small, module-consistent shapes
    B, NUM_IMG_LIP = 2, 2          # batch, extra LR images per sample
    C, H, W = 4, 8, 8
    E = 32                         # embedding_size
    NUM_CLASSES, MAX_ID_SIZE, VALID_STEP = 8, 4, 3

    key = jax.random.PRNGKey(0)
    k1, k2, _ = jax.random.split(key, 3)
    inp = 0.1 * jax.random.normal(k1, (B, NUM_IMG_LIP + 1, C, H, W), dtype=jnp.float32)
    # make one LR image identical to its HR image to exercise the equality gate
    inp = inp.at[0, 1].set(inp[0, 0])
    out = jax.random.normal(k2, (B, NUM_IMG_LIP + 1, E), dtype=jnp.float32)
    labels = jnp.array([1, 3], dtype=jnp.int32)

    loss_mod = LipschitzLossJAX(embedding_size=E, num_classes=NUM_CLASSES,
                                max_id_size=MAX_ID_SIZE, valid_step=VALID_STEP,
                                squared=False, lip=0.01, detach_HR=True,
                                lip_negative=True)

    loss = loss_mod(inp, out, labels)
    loss = jax.block_until_ready(loss)

    ref = _reference_loss(np.asarray(inp), np.asarray(out), np.asarray(labels),
                          loss_mod.validness, lip=0.01, squared=False,
                          lip_negative=True)

    assert np.isfinite(float(loss)), "kernel produced non-finite loss"
    np.testing.assert_allclose(float(loss), float(ref), rtol=5e-3, atol=1e-5)
    print("KERNEL_OK")
</pallas_src>

<mosaic_0001>
module attributes {stable_mosaic.version = 11 : i64} {
  func.func @_lipschitz_kernel(%arg0: i32, %arg1: memref<2x3x256xf32, #tpu.memory_space<vmem>>, %arg2: memref<2x3x32xf32, #tpu.memory_space<vmem>>, %arg3: memref<1x2xf32, #tpu.memory_space<vmem>>, %arg4: memref<2xf32, #tpu.memory_space<smem>>, %arg5: memref<2x2x2xf32, #tpu.memory_space<vmem>>, %arg6: memref<2x2x1xf32, #tpu.memory_space<vmem>>, %arg7: memref<2x2x1xf32, #tpu.memory_space<vmem>>, %arg8: memref<1x2xf32, #tpu.memory_space<vmem>>) attributes {dimension_semantics = [#tpu.dimension_semantics<arbitrary>], iteration_bounds = array<i64: 1>, scalar_prefetch = 0 : i64, scratch_operands = 4 : i64, tpu.core_type = #tpu.core_type<tc>, window_params = [{transform_indices = @transform_0, window_bounds = array<i64: 2, 3, 256>}, {pipeline_mode = #tpu.pipeline_mode<synchronous>, transform_indices = @transform_1, window_bounds = array<i64: 2, 3, 32>}, {pipeline_mode = #tpu.pipeline_mode<synchronous>, transform_indices = @transform_2, window_bounds = array<i64: 1, 2>}, {transform_indices = @transform_3, window_bounds = array<i64: 2>}]} {
    %c0_i32 = arith.constant 0 : i32
    %0 = arith.cmpi eq, %arg0, %c0_i32 : i32
    %1 = arith.extui %0 : i1 to i32
    %c0_i32_0 = arith.constant 0 : i32
    %2 = arith.cmpi ne, %1, %c0_i32_0 : i32
    scf.if %2 {
      %cst_56 = arith.constant 0.000000e+00 : f32
      %70 = vector.broadcast %cst_56 : f32 to vector<2x2x2xf32>
      %c0_57 = arith.constant 0 : index
      %c0_58 = arith.constant 0 : index
      %c0_59 = arith.constant 0 : index
      %71 = vector.load %arg5[%c0_57, %c0_58, %c0_59] : memref<2x2x2xf32, #tpu.memory_space<vmem>>, vector<2x2x2xf32>
      tpu.vector_store %arg5[%c0_57, %c0_58, %c0_59], %70 {strides = array<i32>} : memref<2x2x2xf32, #tpu.memory_space<vmem>>, vector<2x2x2xf32>,
      %cst_60 = arith.constant 0.000000e+00 : f32
      %72 = vector.broadcast %cst_60 : f32 to vector<2x2x1xf32>
      %c0_61 = arith.constant 0 : index
      %c0_62 = arith.constant 0 : index
      %c0_63 = arith.constant 0 : index
      %73 = vector.load %arg6[%c0_61, %c0_62, %c0_63] : memref<2x2x1xf32, #tpu.memory_space<vmem>>, vector<2x2x1xf32>
      tpu.vector_store %arg6[%c0_61, %c0_62, %c0_63], %72 {strides = array<i32>} : memref<2x2x1xf32, #tpu.memory_space<vmem>>, vector<2x2x1xf32>,
      %cst_64 = arith.constant 0.000000e+00 : f32
      %74 = vector.broadcast %cst_64 : f32 to vector<2x2x1xf32>
      %c0_65 = arith.constant 0 : index
      %c0_66 = arith.constant 0 : index
      %c0_67 = arith.constant 0 : index
      %75 = vector.load %arg7[%c0_65, %c0_66, %c0_67] : memref<2x2x1xf32, #tpu.memory_space<vmem>>, vector<2x2x1xf32>
      tpu.vector_store %arg7[%c0_65, %c0_66, %c0_67], %74 {strides = array<i32>} : memref<2x2x1xf32, #tpu.memory_space<vmem>>, vector<2x2x1xf32>,
      %cst_68 = arith.constant 0.000000e+00 : f32
      %76 = vector.broadcast %cst_68 : f32 to vector<1x2xf32>
      %c0_69 = arith.constant 0 : index
      %c0_70 = arith.constant 0 : index
      %77 = vector.load %arg8[%c0_69, %c0_70] : memref<1x2xf32, #tpu.memory_space<vmem>>, vector<1x2xf32>
      tpu.vector_store %arg8[%c0_69, %c0_70], %76 {strides = array<i32>} : memref<1x2xf32, #tpu.memory_space<vmem>>, vector<1x2xf32>,
    } else {
    }
    %c0 = arith.constant 0 : index
    %c0_1 = arith.constant 0 : index
    %c0_2 = arith.constant 0 : index
    %3 = vector.load %arg1[%c0, %c0_1, %c0_2] : memref<2x3x256xf32, #tpu.memory_space<vmem>>, vector<2x1x256xf32>
    %4 = vector.shape_cast %3 : vector<2x1x256xf32> to vector<2x256xf32>
    %cst = arith.constant 1.000000e+00 : f32
    %5 = vector.broadcast %cst : f32 to vector<1x256xf32>
    %c0_3 = arith.constant 0 : index
    %c0_4 = arith.constant 0 : index
    %6 = vector.load %arg8[%c0_3, %c0_4] : memref<1x2xf32, #tpu.memory_space<vmem>>, vector<1x2xf32>
    %7 = arith.mulf %4, %4 : vector<2x256xf32>
    %cst_5 = arith.constant dense<0.000000e+00> : vector<1x2xf32>
    %8 = tpu.matmul %5, %7, %cst_5 {dimension_numbers = #tpu.dot_dimension_numbers<[1], [1], [0], [0], [0, 0, 1, 0], [], []>} : vector<1x256xf32>, vector<2x256xf32>, vector<1x2xf32> -> vector<1x2xf32>
    %9 = arith.addf %6, %8 : vector<1x2xf32>
    %c0_6 = arith.constant 0 : index
    %c0_7 = arith.constant 0 : index
    %10 = vector.load %arg8[%c0_6, %c0_7] : memref<1x2xf32, #tpu.memory_space<vmem>>, vector<1x2xf32>
    tpu.vector_store %arg8[%c0_6, %c0_7], %9 {strides = array<i32>} : memref<1x2xf32, #tpu.memory_space<vmem>>, vector<1x2xf32>,
    %c0_8 = arith.constant 0 : index
    %c1 = arith.constant 1 : index
    %c0_9 = arith.constant 0 : index
    %11 = vector.load %arg1[%c0_8, %c1, %c0_9] : memref<2x3x256xf32, #tpu.memory_space<vmem>>, vector<2x1x256xf32>
    %12 = vector.shape_cast %11 : vector<2x1x256xf32> to vector<2x256xf32>
    %c0_10 = arith.constant 0 : index
    %c0_11 = arith.constant 0 : index
    %c0_12 = arith.constant 0 : index
    %13 = vector.load %arg5[%c0_10, %c0_11, %c0_12] : memref<2x2x2xf32, #tpu.memory_space<vmem>>, vector<1x2x2xf32>
    %14 = vector.shape_cast %13 : vector<1x2x2xf32> to vector<2x2xf32>
    %cst_13 = arith.constant dense<0.000000e+00> : vector<2x2xf32>
    %15 = tpu.matmul %12, %4, %cst_13 {dimension_numbers = #tpu.dot_dimension_numbers<[1], [1], [0], [0], [0, 0, 1, 0], [], []>} : vector<2x256xf32>, vector<2x256xf32>, vector<2x2xf32> -> vector<2x2xf32>
    %16 = arith.addf %14, %15 : vector<2x2xf32>
    %c0_14 = arith.constant 0 : index
    %c0_15 = arith.constant 0 : index
    %c0_16 = arith.constant 0 : index
    %17 = vector.load %arg5[%c0_14, %c0_15, %c0_16] : memref<2x2x2xf32, #tpu.memory_space<vmem>>, vector<1x2x2xf32>
    %18 = vector.shape_cast %17 : vector<1x2x2xf32> to vector<2x2xf32>
    %19 = vector.shape_cast %16 : vector<2x2xf32> to vector<1x2x2xf32>
    tpu.vector_store %arg5[%c0_14, %c0_15, %c0_16], %19 {strides = array<i32>} : memref<2x2x2xf32, #tpu.memory_space<vmem>>, vector<1x2x2xf32>,
    %c0_17 = arith.constant 0 : index
    %c0_18 = arith.constant 0 : index
    %c0_19 = arith.constant 0 : index
    %20 = vector.load %arg6[%c0_17, %c0_18, %c0_19] : memref<2x2x1xf32, #tpu.memory_space<vmem>>, vector<1x2x1xf32>
    %21 = vector.shape_cast %20 : vector<1x2x1xf32> to vector<2x1xf32>
    %22 = arith.mulf %12, %12 : vector<2x256xf32>
    %cst_20 = arith.constant dense<0.000000e+00> : vector<2xf32>
    %23 = vector.multi_reduction <add>, %22, %cst_20 [1] : vector<2x256xf32> to vector<2xf32>
    %24 = vector.shape_cast %23 : vector<2xf32> to vector<2x1xf32>
    %25 = arith.addf %21, %24 : vector<2x1xf32>
    %c0_21 = arith.constant 0 : index
    %c0_22 = arith.constant 0 : index
    %c0_23 = arith.constant 0 : index
    %26 = vector.load %arg6[%c0_21, %c0_22, %c0_23] : memref<2x2x1xf32, #tpu.memory_space<vmem>>, vector<1x2x1xf32>
    %27 = vector.shape_cast %26 : vector<1x2x1xf32> to vector<2x1xf32>
    %28 = vector.shape_cast %25 : vector<2x1xf32> to vector<1x2x1xf32>
    tpu.vector_store %arg6[%c0_21, %c0_22, %c0_23], %28 {strides = array<i32>} : memref<2x2x1xf32, #tpu.memory_space<vmem>>, vector<1x2x1xf32>,
    %29 = arith.subf %12, %4 : vector<2x256xf32>
    %c0_24 = arith.constant 0 : index
    %c0_25 = arith.constant 0 : index
    %c0_26 = arith.constant 0 : index
    %30 = vector.load %arg7[%c0_24, %c0_25, %c0_26] : memref<2x2x1xf32, #tpu.memory_space<vmem>>, vector<1x2x1xf32>
    %31 = vector.shape_cast %30 : vector<1x2x1xf32> to vector<2x1xf32>
    %32 = arith.mulf %29, %29 : vector<2x256xf32>
    %cst_27 = arith.constant dense<0.000000e+00> : vector<2xf32>
    %33 = vector.multi_reduction <add>, %32, %cst_27 [1] : vector<2x256xf32> to vector<2xf32>
    %34 = vector.shape_cast %33 : vector<2xf32> to vector<2x1xf32>
    %35 = arith.addf %31, %34 : vector<2x1xf32>
    %c0_28 = arith.constant 0 : index
    %c0_29 = arith.constant 0 : index
    %c0_30 = arith.constant 0 : index
    %36 = vector.load %arg7[%c0_28, %c0_29, %c0_30] : memref<2x2x1xf32, #tpu.memory_space<vmem>>, vector<1x2x1xf32>
    %37 = vector.shape_cast %36 : vector<1x2x1xf32> to vector<2x1xf32>
    %38 = vector.shape_cast %35 : vector<2x1xf32> to vector<1x2x1xf32>
    tpu.vector_store %arg7[%c0_28, %c0_29, %c0_30], %38 {strides = array<i32>} : memref<2x2x1xf32, #tpu.memory_space<vmem>>, vector<1x2x1xf32>,
    %c0_31 = arith.constant 0 : index
    %c2 = arith.constant 2 : index
    %c0_32 = arith.constant 0 : index
    %39 = vector.load %arg1[%c0_31, %c2, %c0_32] : memref<2x3x256xf32, #tpu.memory_space<vmem>>, vector<2x1x256xf32>
    %40 = vector.shape_cast %39 : vector<2x1x256xf32> to vector<2x256xf32>
    %c1_33 = arith.constant 1 : index
    %c0_34 = arith.constant 0 : index
    %c0_35 = arith.constant 0 : index
    %41 = vector.load %arg5[%c1_33, %c0_34, %c0_35] : memref<2x2x2xf32, #tpu.memory_space<vmem>>, vector<1x2x2xf32>
    %42 = vector.shape_cast %41 : vector<1x2x2xf32> to vector<2x2xf32>
    %cst_36 = arith.constant dense<0.000000e+00> : vector<2x2xf32>
    %43 = tpu.matmul %40, %4, %cst_36 {dimension_numbers = #tpu.dot_dimension_numbers<[1], [1], [0], [0], [0, 0, 1, 0], [], []>} : vector<2x256xf32>, vector<2x256xf32>, vector<2x2xf32> -> vector<2x2xf32>
    %44 = arith.addf %42, %43 : vector<2x2xf32>
    %c1_37 = arith.constant 1 : index
    %c0_38 = arith.constant 0 : index
    %c0_39 = arith.constant 0 : index
    %45 = vector.load %arg5[%c1_37, %c0_38, %c0_39] : memref<2x2x2xf32, #tpu.memory_space<vmem>>, vector<1x2x2xf32>
    %46 = vector.shape_cast %45 : vector<1x2x2xf32> to vector<2x2xf32>
    %47 = vector.shape_cast %44 : vector<2x2xf32> to vector<1x2x2xf32>
    tpu.vector_store %arg5[%c1_37, %c0_38, %c0_39], %47 {strides = array<i32>} : memref<2x2x2xf32, #tpu.memory_space<vmem>>, vector<1x2x2xf32>,
    %c1_40 = arith.constant 1 : index
    %c0_41 = arith.constant 0 : index
    %c0_42 = arith.constant 0 : index
    %48 = vector.load %arg6[%c1_40, %c0_41, %c0_42] : memref<2x2x1xf32, #tpu.memory_space<vmem>>, vector<1x2x1xf32>
    %49 = vector.shape_cast %48 : vector<1x2x1xf32> to vector<2x1xf32>
    %50 = arith.mulf %40, %40 : vector<2x256xf32>
    %cst_43 = arith.constant dense<0.000000e+00> : vector<2xf32>
    %51 = vector.multi_reduction <add>, %50, %cst_43 [1] : vector<2x256xf32> to vector<2xf32>
    %52 = vector.shape_cast %51 : vector<2xf32> to vector<2x1xf32>
    %53 = arith.addf %49, %52 : vector<2x1xf32>
    %c1_44 = arith.constant 1 : index
    %c0_45 = arith.constant 0 : index
    %c0_46 = arith.constant 0 : index
    %54 = vector.load %arg6[%c1_44, %c0_45, %c0_46] : memref<2x2x1xf32, #tpu.memory_space<vmem>>, vector<1x2x1xf32>
    %55 = vector.shape_cast %54 : vector<1x2x1xf32> to vector<2x1xf32>
    %56 = vector.shape_cast %53 : vector<2x1xf32> to vector<1x2x1xf32>
    tpu.vector_store %arg6[%c1_44, %c0_45, %c0_46], %56 {strides = array<i32>} : memref<2x2x1xf32, #tpu.memory_space<vmem>>, vector<1x2x1xf32>,
    %57 = arith.subf %40, %4 : vector<2x256xf32>
    %c1_47 = arith.constant 1 : index
    %c0_48 = arith.constant 0 : index
    %c0_49 = arith.constant 0 : index
    %58 = vector.load %arg7[%c1_47, %c0_48, %c0_49] : memref<2x2x1xf32, #tpu.memory_space<vmem>>, vector<1x2x1xf32>
    %59 = vector.shape_cast %58 : vector<1x2x1xf32> to vector<2x1xf32>
    %60 = arith.mulf %57, %57 : vector<2x256xf32>
    %cst_50 = arith.constant dense<0.000000e+00> : vector<2xf32>
    %61 = vector.multi_reduction <add>, %60, %cst_50 [1] : vector<2x256xf32> to vector<2xf32>
    %62 = vector.shape_cast %61 : vector<2xf32> to vector<2x1xf32>
    %63 = arith.addf %59, %62 : vector<2x1xf32>
    %c1_51 = arith.constant 1 : index
    %c0_52 = arith.constant 0 : index
    %c0_53 = arith.constant 0 : index
    %64 = vector.load %arg7[%c1_51, %c0_52, %c0_53] : memref<2x2x1xf32, #tpu.memory_space<vmem>>, vector<1x2x1xf32>
    %65 = vector.shape_cast %64 : vector<1x2x1xf32> to vector<2x1xf32>
    %66 = vector.shape_cast %63 : vector<2x1xf32> to vector<1x2x1xf32>
    tpu.vector_store %arg7[%c1_51, %c0_52, %c0_53], %66 {strides = array<i32>} : memref<2x2x1xf32, #tpu.memory_space<vmem>>, vector<1x2x1xf32>,
    %c0_i32_54 = arith.constant 0 : i32
    %67 = arith.cmpi eq, %arg0, %c0_i32_54 : i32
    %68 = arith.extui %67 : i1 to i32
    %c0_i32_55 = arith.constant 0 : i32
    %69 = arith.cmpi ne, %68, %c0_i32_55 : i32
    scf.if %69 {
      %c0_56 = arith.constant 0 : index
      %c0_57 = arith.constant 0 : index
      %70 = vector.load %arg3[%c0_56, %c0_57] : memref<1x2xf32, #tpu.memory_space<vmem>>, vector<1x2xf32>
      %c0_58 = arith.constant 0 : index
      %c0_59 = arith.constant 0 : index
      %c0_60 = arith.constant 0 : index
      %71 = vector.load %arg2[%c0_58, %c0_59, %c0_60] : memref<2x3x32xf32, #tpu.memory_space<vmem>>, vector<2x1x32xf32>
      %72 = vector.shape_cast %71 : vector<2x1x32xf32> to vector<2x32xf32>
      %73 = arith.mulf %72, %72 : vector<2x32xf32>
      %cst_61 = arith.constant dense<0.000000e+00> : vector<2xf32>
      %74 = vector.multi_reduction <add>, %73, %cst_61 [1] : vector<2x32xf32> to vector<2xf32>
      %75 = vector.shape_cast %74 : vector<2xf32> to vector<2x1xf32>
      %76 = math.rsqrt %75 : vector<2x1xf32>
      %77 = vector.broadcast %76 : vector<2x1xf32> to vector<2x32xf32>
      %78 = arith.mulf %72, %77 : vector<2x32xf32>
      %c0_62 = arith.constant 0 : index
      %c0_63 = arith.constant 0 : index
      %79 = vector.load %arg8[%c0_62, %c0_63] : memref<1x2xf32, #tpu.memory_space<vmem>>, vector<1x2xf32>
      %80 = tpu.iota {dimensions = array<i32: 0>} : vector<2x2xi32>
      %81 = tpu.iota {dimensions = array<i32: 1>} : vector<2x2xi32>
      %82 = arith.cmpi eq, %80, %81 : vector<2x2xi32>
      %83 = arith.cmpi ne, %80, %81 : vector<2x2xi32>
      %84 = arith.extui %83 : vector<2x2xi1> to vector<2x2xi32>
      %85 = arith.sitofp %84 : vector<2x2xi32> to vector<2x2xf32>
      %c0_64 = arith.constant 0 : index
      %c1_65 = arith.constant 1 : index
      %c0_66 = arith.constant 0 : index
      %86 = vector.load %arg2[%c0_64, %c1_65, %c0_66] : memref<2x3x32xf32, #tpu.memory_space<vmem>>, vector<2x1x32xf32>
      %87 = vector.shape_cast %86 : vector<2x1x32xf32> to vector<2x32xf32>
      %88 = arith.mulf %87, %87 : vector<2x32xf32>
      %cst_67 = arith.constant dense<0.000000e+00> : vector<2xf32>
      %89 = vector.multi_reduction <add>, %88, %cst_67 [1] : vector<2x32xf32> to vector<2xf32>
      %90 = vector.shape_cast %89 : vector<2xf32> to vector<2x1xf32>
      %91 = math.rsqrt %90 : vector<2x1xf32>
      %92 = vector.broadcast %91 : vector<2x1xf32> to vector<2x32xf32>
      %93 = arith.mulf %87, %92 : vector<2x32xf32>
      %cst_68 = arith.constant dense<0.000000e+00> : vector<2x2xf32>
      %94 = tpu.matmul %93, %78, %cst_68 {dimension_numbers = #tpu.dot_dimension_numbers<[1], [1], [0], [0], [0, 0, 1, 0], [], []>} : vector<2x32xf32>, vector<2x32xf32>, vector<2x2xf32> -> vector<2x2xf32>
      %c0_69 = arith.constant 0 : index
      %c0_70 = arith.constant 0 : index
      %c0_71 = arith.constant 0 : index
      %95 = vector.load %arg6[%c0_69, %c0_70, %c0_71] : memref<2x2x1xf32, #tpu.memory_space<vmem>>, vector<1x2x1xf32>
      %96 = vector.shape_cast %95 : vector<1x2x1xf32> to vector<2x1xf32>
      %c0_72 = arith.constant 0 : index
      %c0_73 = arith.constant 0 : index
      %c0_74 = arith.constant 0 : index
      %97 = vector.load %arg7[%c0_72, %c0_73, %c0_74] : memref<2x2x1xf32, #tpu.memory_space<vmem>>, vector<1x2x1xf32>
      %98 = vector.shape_cast %97 : vector<1x2x1xf32> to vector<2x1xf32>
      %c0_75 = arith.constant 0 : index
      %c0_76 = arith.constant 0 : index
      %c0_77 = arith.constant 0 : index
      %99 = vector.load %arg5[%c0_75, %c0_76, %c0_77] : memref<2x2x2xf32, #tpu.memory_space<vmem>>, vector<1x2x2xf32>
      %100 = vector.shape_cast %99 : vector<1x2x2xf32> to vector<2x2xf32>
      %cst_78 = arith.constant 0.000000e+00 : f32
      %101 = vector.broadcast %cst_78 : f32 to vector<2x1xf32>
      %102 = arith.cmpf oeq, %98, %101 : vector<2x1xf32>
      %cst_79 = arith.constant 0.000000e+00 : f32
      %103 = vector.broadcast %cst_79 : f32 to vector<2x2xf32>
      %104 = arith.select %82, %94, %103 : vector<2x2xi1>, vector<2x2xf32>
      %cst_80 = arith.constant dense<0.000000e+00> : vector<2xf32>
      %105 = vector.multi_reduction <add>, %104, %cst_80 [1] : vector<2x2xf32> to vector<2xf32>
      %106 = vector.shape_cast %105 : vector<2xf32> to vector<2x1xf32>
      %cst_81 = arith.constant 1.000000e-24 : f32
      %107 = vector.broadcast %cst_81 : f32 to vector<2x1xf32>
      %108 = arith.maximumf %98, %107 : vector<2x1xf32>
      %109 = math.rsqrt %108 : vector<2x1xf32>
      %cst_82 = arith.constant 1.000000e+00 : f32
      %110 = vector.broadcast %cst_82 : f32 to vector<2x1xf32>
      %111 = arith.subf %110, %106 : vector<2x1xf32>
      %112 = arith.mulf %111, %109 : vector<2x1xf32>
      %cst_83 = arith.constant 0.00999999977 : f32
      %113 = vector.broadcast %cst_83 : f32 to vector<2x1xf32>
      %114 = arith.subf %112, %113 : vector<2x1xf32>
      %cst_84 = arith.constant 0.000000e+00 : f32
      %115 = vector.broadcast %cst_84 : f32 to vector<2x1xf32>
      %116 = arith.maximumf %114, %115 : vector<2x1xf32>
      %cst_85 = arith.constant 0.000000e+00 : f32
      %117 = vector.broadcast %cst_85 : f32 to vector<2x1xf32>
      %118 = arith.select %102, %117, %116 : vector<2x1xi1>, vector<2x1xf32>
      %119 = vector.shape_cast %118 : vector<2x1xf32> to vector<1x2x1xf32>
      %cst_86 = arith.constant dense<0.000000e+00> : vector<1xf32>
      %120 = vector.multi_reduction <add>, %119, %cst_86 [1, 2] : vector<1x2x1xf32> to vector<1xf32>
      %121 = vector.shape_cast %120 : vector<1xf32> to vector<1x1x1xf32>
      %122 = vector.extract %121[0, 0, 0] : f32 from vector<1x1x1xf32>
      %cst_87 = arith.constant 0.000000e+00 : f32
      %123 = arith.addf %cst_87, %122 : f32
      %124 = vector.broadcast %96 : vector<2x1xf32> to vector<2x2xf32>
      %125 = vector.broadcast %79 : vector<1x2xf32> to vector<2x2xf32>
      %126 = arith.addf %124, %125 : vector<2x2xf32>
      %cst_88 = arith.constant 2.000000e+00 : f32
      %127 = vector.broadcast %cst_88 : f32 to vector<2x2xf32>
      %128 = arith.mulf %127, %100 : vector<2x2xf32>
      %129 = arith.subf %126, %128 : vector<2x2xf32>
      %cst_89 = arith.constant 1.000000e-24 : f32
      %130 = vector.broadcast %cst_89 : f32 to vector<2x2xf32>
      %131 = arith.maximumf %129, %130 : vector<2x2xf32>
      %132 = math.rsqrt %131 : vector<2x2xf32>
      %cst_90 = arith.constant 1.000000e+00 : f32
      %133 = vector.broadcast %cst_90 : f32 to vector<2x2xf32>
      %134 = arith.subf %133, %94 : vector<2x2xf32>
      %135 = arith.mulf %134, %132 : vector<2x2xf32>
      %cst_91 = arith.constant 0.00999999977 : f32
      %136 = vector.broadcast %cst_91 : f32 to vector<2x2xf32>
      %137 = arith.subf %135, %136 : vector<2x2xf32>
      %cst_92 = arith.constant 0.000000e+00 : f32
      %138 = vector.broadcast %cst_92 : f32 to vector<2x2xf32>
      %139 = arith.maximumf %137, %138 : vector<2x2xf32>
      %140 = arith.mulf %139, %85 : vector<2x2xf32>
      %141 = vector.broadcast %70 : vector<1x2xf32> to vector<2x2xf32>
      %142 = arith.mulf %140, %141 : vector<2x2xf32>
      %cst_93 = arith.constant dense<0.000000e+00> : vector<2xf32>
      %143 = vector.multi_reduction <add>, %142, %cst_93 [1] : vector<2x2xf32> to vector<2xf32>
      %144 = vector.shape_cast %143 : vector<2xf32> to vector<2x1xf32>
      %cst_94 = arith.constant 0.000000e+00 : f32
      %145 = vector.broadcast %cst_94 : f32 to vector<2x1xf32>
      %146 = arith.select %102, %145, %144 : vector<2x1xi1>, vector<2x1xf32>
      %147 = vector.shape_cast %146 : vector<2x1xf32> to vector<1x2x1xf32>
      %cst_95 = arith.constant dense<0.000000e+00> : vector<1xf32>
      %148 = vector.multi_reduction <add>, %147, %cst_95 [1, 2] : vector<1x2x1xf32> to vector<1xf32>
      %149 = vector.shape_cast %148 : vector<1xf32> to vector<1x1x1xf32>
      %150 = vector.extract %149[0, 0, 0] : f32 from vector<1x1x1xf32>
      %cst_96 = arith.constant 0.000000e+00 : f32
      %151 = arith.addf %cst_96, %150 : f32
      %c0_97 = arith.constant 0 : index
      %c2_98 = arith.constant 2 : index
      %c0_99 = arith.constant 0 : index
      %152 = vector.load %arg2[%c0_97, %c2_98, %c0_99] : memref<2x3x32xf32, #tpu.memory_space<vmem>>, vector<2x1x32xf32>
      %153 = vector.shape_cast %152 : vector<2x1x32xf32> to vector<2x32xf32>
      %154 = arith.mulf %153, %153 : vector<2x32xf32>
      %cst_100 = arith.constant dense<0.000000e+00> : vector<2xf32>
      %155 = vector.multi_reduction <add>, %154, %cst_100 [1] : vector<2x32xf32> to vector<2xf32>
      %156 = vector.shape_cast %155 : vector<2xf32> to vector<2x1xf32>
      %157 = math.rsqrt %156 : vector<2x1xf32>
      %158 = vector.broadcast %157 : vector<2x1xf32> to vector<2x32xf32>
      %159 = arith.mulf %153, %158 : vector<2x32xf32>
      %cst_101 = arith.constant dense<0.000000e+00> : vector<2x2xf32>
      %160 = tpu.matmul %159, %78, %cst_101 {dimension_numbers = #tpu.dot_dimension_numbers<[1], [1], [0], [0], [0, 0, 1, 0], [], []>} : vector<2x32xf32>, vector<2x32xf32>, vector<2x2xf32> -> vector<2x2xf32>
      %c1_102 = arith.constant 1 : index
      %c0_103 = arith.constant 0 : index
      %c0_104 = arith.constant 0 : index
      %161 = vector.load %arg6[%c1_102, %c0_103, %c0_104] : memref<2x2x1xf32, #tpu.memory_space<vmem>>, vector<1x2x1xf32>
      %162 = vector.shape_cast %161 : vector<1x2x1xf32> to vector<2x1xf32>
      %c1_105 = arith.constant 1 : index
      %c0_106 = arith.constant 0 : index
      %c0_107 = arith.constant 0 : index
      %163 = vector.load %arg7[%c1_105, %c0_106, %c0_107] : memref<2x2x1xf32, #tpu.memory_space<vmem>>, vector<1x2x1xf32>
      %164 = vector.shape_cast %163 : vector<1x2x1xf32> to vector<2x1xf32>
      %c1_108 = arith.constant 1 : index
      %c0_109 = arith.constant 0 : index
      %c0_110 = arith.constant 0 : index
      %165 = vector.load %arg5[%c1_108, %c0_109, %c0_110] : memref<2x2x2xf32, #tpu.memory_space<vmem>>, vector<1x2x2xf32>
      %166 = vector.shape_cast %165 : vector<1x2x2xf32> to vector<2x2xf32>
      %cst_111 = arith.constant 0.000000e+00 : f32
      %167 = vector.broadcast %cst_111 : f32 to vector<2x1xf32>
      %168 = arith.cmpf oeq, %164, %167 : vector<2x1xf32>
      %cst_112 = arith.constant 0.000000e+00 : f32
      %169 = vector.broadcast %cst_112 : f32 to vector<2x2xf32>
      %170 = arith.select %82, %160, %169 : vector<2x2xi1>, vector<2x2xf32>
      %cst_113 = arith.constant dense<0.000000e+00> : vector<2xf32>
      %171 = vector.multi_reduction <add>, %170, %cst_113 [1] : vector<2x2xf32> to vector<2xf32>
      %172 = vector.shape_cast %171 : vector<2xf32> to vector<2x1xf32>
      %cst_114 = arith.constant 1.000000e-24 : f32
      %173 = vector.broadcast %cst_114 : f32 to vector<2x1xf32>
      %174 = arith.maximumf %164, %173 : vector<2x1xf32>
      %175 = math.rsqrt %174 : vector<2x1xf32>
      %cst_115 = arith.constant 1.000000e+00 : f32
      %176 = vector.broadcast %cst_115 : f32 to vector<2x1xf32>
      %177 = arith.subf %176, %172 : vector<2x1xf32>
      %178 = arith.mulf %177, %175 : vector<2x1xf32>
      %cst_116 = arith.constant 0.00999999977 : f32
      %179 = vector.broadcast %cst_116 : f32 to vector<2x1xf32>
      %180 = arith.subf %178, %179 : vector<2x1xf32>
      %cst_117 = arith.constant 0.000000e+00 : f32
      %181 = vector.broadcast %cst_117 : f32 to vector<2x1xf32>
      %182 = arith.maximumf %180, %181 : vector<2x1xf32>
      %cst_118 = arith.constant 0.000000e+00 : f32
      %183 = vector.broadcast %cst_118 : f32 to vector<2x1xf32>
      %184 = arith.select %168, %183, %182 : vector<2x1xi1>, vector<2x1xf32>
      %185 = vector.shape_cast %184 : vector<2x1xf32> to vector<1x2x1xf32>
      %cst_119 = arith.constant dense<0.000000e+00> : vector<1xf32>
      %186 = vector.multi_reduction <add>, %185, %cst_119 [1, 2] : vector<1x2x1xf32> to vector<1xf32>
      %187 = vector.shape_cast %186 : vector<1xf32> to vector<1x1x1xf32>
      %188 = vector.extract %187[0, 0, 0] : f32 from vector<1x1x1xf32>
      %189 = arith.addf %123, %188 : f32
      %190 = vector.broadcast %162 : vector<2x1xf32> to vector<2x2xf32>
      %191 = vector.broadcast %79 : vector<1x2xf32> to vector<2x2xf32>
      %192 = arith.addf %190, %191 : vector<2x2xf32>
      %cst_120 = arith.constant 2.000000e+00 : f32
      %193 = vector.broadcast %cst_120 : f32 to vector<2x2xf32>
      %194 = arith.mulf %193, %166 : vector<2x2xf32>
      %195 = arith.subf %192, %194 : vector<2x2xf32>
      %cst_121 = arith.constant 1.000000e-24 : f32
      %196 = vector.broadcast %cst_121 : f32 to vector<2x2xf32>
      %197 = arith.maximumf %195, %196 : vector<2x2xf32>
      %198 = math.rsqrt %197 : vector<2x2xf32>
      %cst_122 = arith.constant 1.000000e+00 : f32
      %199 = vector.broadcast %cst_122 : f32 to vector<2x2xf32>
      %200 = arith.subf %199, %160 : vector<2x2xf32>
      %201 = arith.mulf %200, %198 : vector<2x2xf32>
      %cst_123 = arith.constant 0.00999999977 : f32
      %202 = vector.broadcast %cst_123 : f32 to vector<2x2xf32>
      %203 = arith.subf %201, %202 : vector<2x2xf32>
      %cst_124 = arith.constant 0.000000e+00 : f32
      %204 = vector.broadcast %cst_124 : f32 to vector<2x2xf32>
      %205 = arith.maximumf %203, %204 : vector<2x2xf32>
      %206 = arith.mulf %205, %85 : vector<2x2xf32>
      %207 = vector.broadcast %70 : vector<1x2xf32> to vector<2x2xf32>
      %208 = arith.mulf %206, %207 : vector<2x2xf32>
      %cst_125 = arith.constant dense<0.000000e+00> : vector<2xf32>
      %209 = vector.multi_reduction <add>, %208, %cst_125 [1] : vector<2x2xf32> to vector<2xf32>
      %210 = vector.shape_cast %209 : vector<2xf32> to vector<2x1xf32>
      %cst_126 = arith.constant 0.000000e+00 : f32
      %211 = vector.broadcast %cst_126 : f32 to vector<2x1xf32>
      %212 = arith.select %168, %211, %210 : vector<2x1xi1>, vector<2x1xf32>
      %213 = vector.shape_cast %212 : vector<2x1xf32> to vector<1x2x1xf32>
      %cst_127 = arith.constant dense<0.000000e+00> : vector<1xf32>
      %214 = vector.multi_reduction <add>, %213, %cst_127 [1, 2] : vector<1x2x1xf32> to vector<1xf32>
      %215 = vector.shape_cast %214 : vector<1xf32> to vector<1x1x1xf32>
      %216 = vector.extract %215[0, 0, 0] : f32 from vector<1x1x1xf32>
      %217 = arith.addf %151, %216 : f32
      %cst_128 = arith.constant 2.500000e-01 : f32
      %218 = arith.mulf %189, %cst_128 : f32
      %c0_129 = arith.constant 0 : index
      %219 = memref.load %arg4[%c0_129] : memref<2xf32, #tpu.memory_space<smem>>
      memref.store %218, %arg4[%c0_129] : memref<2xf32, #tpu.memory_space<smem>>
      %cst_130 = arith.constant 0.000000e+00 : f32
      %220 = arith.subf %cst_130, %217 : f32
      %cst_131 = arith.constant 2.500000e-01 : f32
      %221 = arith.mulf %220, %cst_131 : f32
      %c1_132 = arith.constant 1 : index
      %222 = memref.load %arg4[%c1_132] : memref<2xf32, #tpu.memory_space<smem>>
      memref.store %221, %arg4[%c1_132] : memref<2xf32, #tpu.memory_space<smem>>
    } else {
    }
    return
  }
  func.func @transform_0(%arg0: i32) -> (i32, i32, i32) {
    %c0_i32 = arith.constant 0 : i32
    %c0_i32_0 = arith.constant 0 : i32
    %c0_i32_1 = arith.constant 0 : i32
    return %c0_i32, %c0_i32_0, %arg0 : i32, i32, i32
  }
  func.func @transform_1(%arg0: i32) -> (i32, i32, i32) {
    %c0_i32 = arith.constant 0 : i32
    %c0_i32_0 = arith.constant 0 : i32
    %c0_i32_1 = arith.constant 0 : i32
    %c0_i32_2 = arith.constant 0 : i32
    return %c0_i32, %c0_i32_0, %c0_i32_1 : i32, i32, i32
  }
  func.func @transform_2(%arg0: i32) -> (i32, i32) {
    %c0_i32 = arith.constant 0 : i32
    %c0_i32_0 = arith.constant 0 : i32
    %c0_i32_1 = arith.constant 0 : i32
    return %c0_i32, %c0_i32_0 : i32, i32
  }
  func.func @transform_3(%arg0: i32) -> i32 {
    %c0_i32 = arith.constant 0 : i32
    %c0_i32_0 = arith.constant 0 : i32
    return %c0_i32 : i32
  }
}

</mosaic_0001>

<llo_original>
// kernel: _lipschitz_forward.1
$region0: #{_lipschitz_forward.1}
  #allocation0 [shape = 'u32[]', space=smem, size = 0x4, offset = 0x4, fixed_abs, tag = 'smem constant byte address 0x4 - core index']
  #allocation1 [shape = 'u32[144,128]{1,0:T(1,128)}', space=vmem, size = 0x12000, scoped, tag = 'internal scratch']
  #allocation2 [shape = 'f32[2,2,2]{2,1,0:T(2,128)}', space=vmem, size = 0x800, scoped, tag = 'scratch operand']
  #allocation3 [shape = 'f32[2,2,1]{2,1,0:T(2,128)}', space=vmem, size = 0x800, scoped, tag = 'scratch operand']
  #allocation4 [shape = 'f32[2,2,1]{2,1,0:T(2,128)}', space=vmem, size = 0x800, scoped, tag = 'scratch operand']
  #allocation5 [shape = 'f32[1,2]{1,0:T(1,128)}', space=vmem, size = 0x200, scoped, tag = 'scratch operand']
  %s0 = inlined_call_operand.vmem [shape: f32[2,3,256], index: 0, kind: input, shape index: {}]
  %s1 = inlined_call_operand.vmem [shape: f32[2,3,32], index: 1, kind: input, shape index: {}]
  %s2 = inlined_call_operand.vmem [shape: f32[1,2], index: 2, kind: input, shape index: {}]
  %s3 = inlined_call_operand.vmem [shape: f32[2], index: 3, kind: output, shape index: {}]
  %s4 = sld [smem:[#allocation0]]
  $region30: #{_lipschitz_forward.1} parent=0
    _
  %s6 = ssub.s32 1, %s4
  %s7 = scalar_select 0, %s6, %s4
  $region1: #{_lipschitz_forward.1} parent=0
    #allocation6 [shape = 'u8[512]{0}', space=smem, size = 0x200, scoped, tag = 'output window, operand 0, single buffered']
    #allocation7 [shape = 's32[1]{0}', space=sflag, size = 0x4, scoped, tag = 'scoped memory for _lipschitz_forward.1']
    %8 = vsyncpa [#allocation7], 0
    // Predicated region
    $region2: #{_lipschitz_forward.1} parent=1 // pred_check
      _
    $region3: #{_lipschitz_forward.1} parent=1 // pred_check_branch
      %10 = sbr.rel (0) target = $region5
    $region4: #{_lipschitz_forward.1} parent=1 // pred_region
      _
    $region5: #{_lipschitz_forward.1} parent=1 // pred_fallthru
      _
    // Predicated region
    $region6: #{_lipschitz_forward.1} parent=1 // pred_check
      _
    $region7: #{_lipschitz_forward.1} parent=1 // pred_check_branch
      %12 = sbr.rel (0) target = $region9
    $region8: #{_lipschitz_forward.1} parent=1 // pred_region
      _
    $region9: #{_lipschitz_forward.1} parent=1 // pred_fallthru
      _
    // Predicated region
    $region10: #{_lipschitz_forward.1} parent=1 // pred_check
      _
    $region11: #{_lipschitz_forward.1} parent=1 // pred_check_branch
      %14 = sbr.rel (0) target = $region13
    $region12: #{_lipschitz_forward.1} parent=1 // pred_region
      _
    $region13: #{_lipschitz_forward.1} parent=1 // pred_fallthru
      _
    %p15 = scmp.eq.s32.totalorder 0, 0
    // Predicated region
    $region14: #{_lipschitz_forward.1} parent=1 // pred_check
      %p16 = pneg %p15
    $region15: #{_lipschitz_forward.1} parent=1 // pred_check_branch
      %18 = sbr.rel (%p16) target = $region17
    $region16: #{_lipschitz_forward.1} parent=1 // pred_region
      %vm19 = vcmask 9216
      %20 = vst.msk [vmem:[#allocation2] sm:$0x3] %vm19, 0.0
      %21 = vst.msk [vmem:[#allocation2 + $0x2] sm:$0x3] %vm19, 0.0
      %vm22 = vcmask 1024
      %23 = vst.msk [vmem:[#allocation3] sm:$0x3] %vm22, 0.0
      %24 = vst.msk [vmem:[#allocation3 + $0x2] sm:$0x3] %vm22, 0.0
      %25 = vst.msk [vmem:[#allocation4] sm:$0x3] %vm22, 0.0
      %26 = vst.msk [vmem:[#allocation4 + $0x2] sm:$0x3] %vm22, 0.0
      %vm27 = vcmask 8192
      %28 = vst.msk [vmem:[#allocation5] sm:$0x1] %vm27, 0.0
    $region17: #{_lipschitz_forward.1} parent=1 // pred_fallthru
      _
    %v29 = vld [vmem:[%s0] ss:$4 sm:$0x3]
    %s30 = scalar_lea.vmem %s0, 8
    %v31 = vld [vmem:[%s30] ss:$4 sm:$0x3]
    %v32 = vld [vmem:[#allocation5] sm:$0x1]
    %v33 = vmul.f32 %v29, %v29
    %v34 = vmul.f32 %v31, %v31
    %v37 = vcombine.low %v33, %v34
    %v39 = vunpack.c.l.s4 1966171168
    %v40 = vunpack.c.0.s8 %v39
    %v41 = vlaneseq
    %v42 = vshrl.u32 %v41, 7
    %v43 = vsub.s32 %v40, %v42
    %v44 = vrot.slane %v37, %v43
    %v45 = vcombine.high %v44, %v44
    %v47 = vunpack.c.l.s4 1966171168
    %v48 = vunpack.c.0.s8 %v47
    %v49 = vlaneseq
    %v50 = vshrl.u32 %v49, 7
    %v51 = vsub.s32 %v48, %v50
    %v52 = vrot.slane %v44, %v51
    %v54 = vunpack.c.l.s4 1966171168
    %v55 = vunpack.c.0.s8 %v54
    %v56 = vlaneseq
    %v57 = vshrl.u32 %v56, 7
    %v58 = vsub.s32 %v55, %v57
    %v59 = vrot.slane %v45, %v58
    %62 = vmatprep.subr.mxu0 %v59
    %63 = vmatpush1.xpose.msra.mxu0 %v52
    %64 = vmatprep.subr.mxu0 0.0
    %65 = vmatpush1.xpose.msra.mxu0 0.0
    %66 = vmatprep.subr.mxu0 0.0
    %67 = vmatpush1.xpose.msra.mxu0 0.0
    %68 = vmatprep.subr.mxu0 0.0
    %69 = vmatpush1.xpose.msra.mxu0 0.0
    %70 = vmatprep.subr.mxu0 0.0
    %71 = vmatpush1.xpose.msra.mxu0 0.0
    %72 = vmatprep.subr.mxu0 0.0
    %73 = vmatpush1.xpose.msra.mxu0 0.0
    %74 = vmatprep.subr.mxu0 0.0
    %75 = vmatpush1.xpose.msra.mxu0 0.0
    %76 = vmatprep.subr.mxu0 0.0
    %77 = vmatpush1.xpose.msra.mxu0 0.0
    %78 = vmatprep.subr.mxu0 0.0
    %79 = vmatpush1.xpose.msra.mxu0 0.0
    %80 = vmatprep.subr.mxu0 0.0
    %81 = vmatpush1.xpose.msra.mxu0 0.0
    %82 = vmatprep.subr.mxu0 0.0
    %83 = vmatpush1.xpose.msra.mxu0 0.0
    %84 = vmatprep.subr.mxu0 0.0
    %85 = vmatpush1.xpose.msra.mxu0 0.0
    %86 = vmatprep.subr.mxu0 0.0
    %87 = vmatpush1.xpose.msra.mxu0 0.0
    %88 = vmatprep.subr.mxu0 0.0
    %89 = vmatpush1.xpose.msra.mxu0 0.0
    %90 = vmatprep.subr.mxu0 0.0
    %91 = vmatpush1.xpose.msra.mxu0 0.0
    %92 = vmatprep.subr.mxu0 0.0
    %93 = vmatpush1.xpose.msra.mxu0 0.0
    %94 = vmatprep.subr.mxu0 0.0
    %95 = vmatpush1.xpose.msra.mxu0 0.0
    %96 = vmatprep.subr.mxu0 0.0
    %97 = vmatpush1.xpose.msra.mxu0 0.0
    %98 = vmatprep.subr.mxu0 0.0
    %99 = vmatpush1.xpose.msra.mxu0 0.0
    %100 = vmatprep.subr.mxu0 0.0
    %101 = vmatpush1.xpose.msra.mxu0 0.0
    %102 = vmatprep.subr.mxu0 0.0
    %103 = vmatpush1.xpose.msra.mxu0 0.0
    %104 = vmatprep.subr.mxu0 0.0
    %105 = vmatpush1.xpose.msra.mxu0 0.0
    %106 = vmatprep.subr.mxu0 0.0
    %107 = vmatpush1.xpose.msra.mxu0 0.0
    %108 = vmatprep.subr.mxu0 0.0
    %109 = vmatpush1.xpose.msra.mxu0 0.0
    %110 = vmatprep.subr.mxu0 0.0
    %111 = vmatpush1.xpose.msra.mxu0 0.0
    %112 = vmatprep.subr.mxu0 0.0
    %113 = vmatpush1.xpose.msra.mxu0 0.0
    %114 = vmatprep.subr.mxu0 0.0
    %115 = vmatpush1.xpose.msra.mxu0 0.0
    %116 = vmatprep.subr.mxu0 0.0
    %117 = vmatpush1.xpose.msra.mxu0 0.0
    %118 = vmatprep.subr.mxu0 0.0
    %119 = vmatpush1.xpose.msra.mxu0 0.0
    %120 = vmatprep.subr.mxu0 0.0
    %121 = vmatpush1.xpose.msra.mxu0 0.0
    %122 = vmatprep.subr.mxu0 0.0
    %123 = vmatpush1.xpose.msra.mxu0 0.0
    %124 = vmatprep.subr.mxu0 0.0
    %125 = vmatpush1.xpose.msra.mxu0 0.0
    %126 = vmatprep.mubr.f32.mxu0 1.0
    %127 = vmatmul.mubr.f32.gmra.mrb[0].mxu0 1.0
    %v128 = vpop.f32.mrb[0].mxu0
    %v129 = vadd.f32 0.0, %v128
    %v130 = vpop.f32.mrb[0].mxu0
    %131 = vdwg.mxu0
    %v132 = vadd.f32 %v32, %v129
    %vm133 = vcmask 8192
    %134 = vst.msk [vmem:[#allocation5] sm:$0x1] %vm133, %v132
    %s135 = scalar_lea.vmem %s0, 1
    %v136 = vld [vmem:[%s135] ss:$4 sm:$0x3]
    %s137 = scalar_lea.vmem %s0, 9
    %v138 = vld [vmem:[%s137] ss:$4 sm:$0x3]
    %v139 = vld [vmem:[#allocation2] sm:$0x3]
    %v142 = vcombine.low %v136, %v138
    %v144 = vunpack.c.l.s4 1966171168
    %v145 = vunpack.c.0.s8 %v144
    %v146 = vlaneseq
    %v147 = vshrl.u32 %v146, 7
    %v148 = vsub.s32 %v145, %v147
    %v149 = vrot.slane %v142, %v148
    %v150 = vcombine.high %v149, %v149
    %v152 = vunpack.c.l.s4 1966171168
    %v153 = vunpack.c.0.s8 %v152
    %v154 = vlaneseq
    %v155 = vshrl.u32 %v154, 7
    %v156 = vsub.s32 %v153, %v155
    %v157 = vrot.slane %v149, %v156
    %v159 = vunpack.c.l.s4 1966171168
    %v160 = vunpack.c.0.s8 %v159
    %v161 = vlaneseq
    %v162 = vshrl.u32 %v161, 7
    %v163 = vsub.s32 %v160, %v162
    %v164 = vrot.slane %v150, %v163
    %v169 = vcombine.low %v29, %v31
    %v171 = vunpack.c.l.s4 1966171168
    %v172 = vunpack.c.0.s8 %v171
    %v173 = vlaneseq
    %v174 = vshrl.u32 %v173, 7
    %v175 = vsub.s32 %v172, %v174
    %v176 = vrot.slane %v169, %v175
    %v177 = vcombine.high %v176, %v176
    %v179 = vunpack.c.l.s4 1966171168
    %v180 = vunpack.c.0.s8 %v179
    %v181 = vlaneseq
    %v182 = vshrl.u32 %v181, 7
    %v183 = vsub.s32 %v180, %v182
    %v184 = vrot.slane %v176, %v183
    %v186 = vunpack.c.l.s4 1966171168
    %v187 = vunpack.c.0.s8 %v186
    %v188 = vlaneseq
    %v189 = vshrl.u32 %v188, 7
    %v190 = vsub.s32 %v187, %v189
    %v191 = vrot.slane %v177, %v190
    %194 = vmatprep.subr.mxu0 %v191
    %195 = vmatpush1.xpose.msra.mxu0 %v184
    %196 = vmatprep.subr.mxu0 0.0
    %197 = vmatpush1.xpose.msra.mxu0 0.0
    %198 = vmatprep.subr.mxu0 0.0
    %199 = vmatpush1.xpose.msra.mxu0 0.0
    %200 = vmatprep.subr.mxu0 0.0
    %201 = vmatpush1.xpose.msra.mxu0 0.0
    %202 = vmatprep.subr.mxu0 0.0
    %203 = vmatpush1.xpose.msra.mxu0 0.0
    %204 = vmatprep.subr.mxu0 0.0
    %205 = vmatpush1.xpose.msra.mxu0 0.0
    %206 = vmatprep.subr.mxu0 0.0
    %207 = vmatpush1.xpose.msra.mxu0 0.0
    %208 = vmatprep.subr.mxu0 0.0
    %209 = vmatpush1.xpose.msra.mxu0 0.0
    %210 = vmatprep.subr.mxu0 0.0
    %211 = vmatpush1.xpose.msra.mxu0 0.0
    %212 = vmatprep.subr.mxu0 0.0
    %213 = vmatpush1.xpose.msra.mxu0 0.0
    %214 = vmatprep.subr.mxu0 0.0
    %215 = vmatpush1.xpose.msra.mxu0 0.0
    %216 = vmatprep.subr.mxu0 0.0
    %217 = vmatpush1.xpose.msra.mxu0 0.0
    %218 = vmatprep.subr.mxu0 0.0
    %219 = vmatpush1.xpose.msra.mxu0 0.0
    %220 = vmatprep.subr.mxu0 0.0
    %221 = vmatpush1.xpose.msra.mxu0 0.0
    %222 = vmatprep.subr.mxu0 0.0
    %223 = vmatpush1.xpose.msra.mxu0 0.0
    %224 = vmatprep.subr.mxu0 0.0
    %225 = vmatpush1.xpose.msra.mxu0 0.0
    %226 = vmatprep.subr.mxu0 0.0
    %227 = vmatpush1.xpose.msra.mxu0 0.0
    %228 = vmatprep.subr.mxu0 0.0
    %229 = vmatpush1.xpose.msra.mxu0 0.0
    %230 = vmatprep.subr.mxu0 0.0
    %231 = vmatpush1.xpose.msra.mxu0 0.0
    %232 = vmatprep.subr.mxu0 0.0
    %233 = vmatpush1.xpose.msra.mxu0 0.0
    %234 = vmatprep.subr.mxu0 0.0
    %235 = vmatpush1.xpose.msra.mxu0 0.0
    %236 = vmatprep.subr.mxu0 0.0
    %237 = vmatpush1.xpose.msra.mxu0 0.0
    %238 = vmatprep.subr.mxu0 0.0
    %239 = vmatpush1.xpose.msra.mxu0 0.0
    %240 = vmatprep.subr.mxu0 0.0
    %241 = vmatpush1.xpose.msra.mxu0 0.0
    %242 = vmatprep.subr.mxu0 0.0
    %243 = vmatpush1.xpose.msra.mxu0 0.0
    %244 = vmatprep.subr.mxu0 0.0
    %245 = vmatpush1.xpose.msra.mxu0 0.0
    %246 = vmatprep.subr.mxu0 0.0
    %247 = vmatpush1.xpose.msra.mxu0 0.0
    %248 = vmatprep.subr.mxu0 0.0
    %249 = vmatpush1.xpose.msra.mxu0 0.0
    %250 = vmatprep.subr.mxu0 0.0
    %251 = vmatpush1.xpose.msra.mxu0 0.0
    %252 = vmatprep.subr.mxu0 0.0
    %253 = vmatpush1.xpose.msra.mxu0 0.0
    %254 = vmatprep.subr.mxu0 0.0
    %255 = vmatpush1.xpose.msra.mxu0 0.0
    %256 = vmatprep.subr.mxu0 0.0
    %257 = vmatpush1.xpose.msra.mxu0 0.0
    %258 = vmatprep.mubr.f32.mxu0 %v164
    %259 = vmatmul.mubr.f32.gmra.mrb[0].mxu0 %v157
    %v260 = vpop.f32.mrb[0].mxu0
    %v261 = vadd.f32 0.0, %v260
    %v262 = vpop.f32.mrb[0].mxu0
    %263 = vdwg.mxu0
    %v264 = vadd.f32 %v139, %v261
    %vm265 = vcmask 9216
    %266 = vst.msk [vmem:[#allocation2] sm:$0x3] %vm265, %v264
    %v267 = vld [vmem:[#allocation3] sm:$0x3]
    %v268 = vmul.f32 %v136, %v136
    %v269 = vmul.f32 %v138, %v138
    %v272 = vcombine.low %v268, %v269
    %v274 = vunpack.c.l.s4 1966171168
    %v275 = vunpack.c.0.s8 %v274
    %v276 = vlaneseq
    %v277 = vshrl.u32 %v276, 7
    %v278 = vsub.s32 %v275, %v277
    %v279 = vrot.slane %v272, %v278
    %v280 = vcombine.high %v279, %v279
    %v282 = vunpack.c.l.s4 1966171168
    %v283 = vunpack.c.0.s8 %v282
    %v284 = vlaneseq
    %v285 = vshrl.u32 %v284, 7
    %v286 = vsub.s32 %v283, %v285
    %v287 = vrot.slane %v279, %v286
    %v289 = vunpack.c.l.s4 1966171168
    %v290 = vunpack.c.0.s8 %v289
    %v291 = vlaneseq
    %v292 = vshrl.u32 %v291, 7
    %v293 = vsub.s32 %v290, %v292
    %v294 = vrot.slane %v280, %v293
    %vm297 = vcmask 1041408
    %v298 = vsel %vm297, %v287, 0.0
    %v299 = vsel %vm297, %v294, 0.0
    %v300 = vadd.f32 %v298, %v299
    %301 = vadd.xlane.f32.xlu0 %v300
    %v302 = vpop.xlane.xlu0 %301
    %v303 = vadd.f32 %v267, %v302
    %vm304 = vcmask 1024
    %305 = vst.msk [vmem:[#allocation3] sm:$0x3] %vm304, %v303
    %v306 = vsub.f32 %v136, %v29
    %v307 = vsub.f32 %v138, %v31
    %v308 = vld [vmem:[#allocation4] sm:$0x3]
    %v309 = vmul.f32 %v306, %v306
    %v310 = vmul.f32 %v307, %v307
    %v313 = vcombine.low %v309, %v310
    %v315 = vunpack.c.l.s4 1966171168
    %v316 = vunpack.c.0.s8 %v315
    %v317 = vlaneseq
    %v318 = vshrl.u32 %v317, 7
    %v319 = vsub.s32 %v316, %v318
    %v320 = vrot.slane %v313, %v319
    %v321 = vcombine.high %v320, %v320
    %v323 = vunpack.c.l.s4 1966171168
    %v324 = vunpack.c.0.s8 %v323
    %v325 = vlaneseq
    %v326 = vshrl.u32 %v325, 7
    %v327 = vsub.s32 %v324, %v326
    %v328 = vrot.slane %v320, %v327
    %v330 = vunpack.c.l.s4 1966171168
    %v331 = vunpack.c.0.s8 %v330
    %v332 = vlaneseq
    %v333 = vshrl.u32 %v332, 7
    %v334 = vsub.s32 %v331, %v333
    %v335 = vrot.slane %v321, %v334
    %v338 = vsel %vm297, %v328, 0.0
    %v339 = vsel %vm297, %v335, 0.0
    %v340 = vadd.f32 %v338, %v339
    %341 = vadd.xlane.f32.xlu0 %v340
    %v342 = vpop.xlane.xlu0 %341
    %v343 = vadd.f32 %v308, %v342
    %344 = vst.msk [vmem:[#allocation4] sm:$0x3] %vm304, %v343
    %s345 = scalar_lea.vmem %s0, 2
    %v346 = vld [vmem:[%s345] ss:$4 sm:$0x3]
    %s347 = scalar_lea.vmem %s0, 10
    %v348 = vld [vmem:[%s347] ss:$4 sm:$0x3]
    %s349 = scalar_lea.vmem [#allocation2], 2
    %v350 = vld [vmem:[%s349] sm:$0x3]
    %v353 = vcombine.low %v346, %v348
    %v355 = vunpack.c.l.s4 1966171168
    %v356 = vunpack.c.0.s8 %v355
    %v357 = vlaneseq
    %v358 = vshrl.u32 %v357, 7
    %v359 = vsub.s32 %v356, %v358
    %v360 = vrot.slane %v353, %v359
    %v361 = vcombine.high %v360, %v360
    %v363 = vunpack.c.l.s4 1966171168
    %v364 = vunpack.c.0.s8 %v363
    %v365 = vlaneseq
    %v366 = vshrl.u32 %v365, 7
    %v367 = vsub.s32 %v364, %v366
    %v368 = vrot.slane %v360, %v367
    %v370 = vunpack.c.l.s4 1966171168
    %v371 = vunpack.c.0.s8 %v370
    %v372 = vlaneseq
    %v373 = vshrl.u32 %v372, 7
    %v374 = vsub.s32 %v371, %v373
    %v375 = vrot.slane %v361, %v374
    %378 = vmatprep.subr.mxu0 %v191
    %379 = vmatpush1.xpose.msra.mxu0 %v184
    %380 = vmatprep.subr.mxu0 0.0
    %381 = vmatpush1.xpose.msra.mxu0 0.0
    %382 = vmatprep.subr.mxu0 0.0
    %383 = vmatpush1.xpose.msra.mxu0 0.0
    %384 = vmatprep.subr.mxu0 0.0
    %385 = vmatpush1.xpose.msra.mxu0 0.0
    %386 = vmatprep.subr.mxu0 0.0
    %387 = vmatpush1.xpose.msra.mxu0 0.0
    %388 = vmatprep.subr.mxu0 0.0
    %389 = vmatpush1.xpose.msra.mxu0 0.0
    %390 = vmatprep.subr.mxu0 0.0
    %391 = vmatpush1.xpose.msra.mxu0 0.0
    %392 = vmatprep.subr.mxu0 0.0
    %393 = vmatpush1.xpose.msra.mxu0 0.0
    %394 = vmatprep.subr.mxu0 0.0
    %395 = vmatpush1.xpose.msra.mxu0 0.0
    %396 = vmatprep.subr.mxu0 0.0
    %397 = vmatpush1.xpose.msra.mxu0 0.0
    %398 = vmatprep.subr.mxu0 0.0
    %399 = vmatpush1.xpose.msra.mxu0 0.0
    %400 = vmatprep.subr.mxu0 0.0
    %401 = vmatpush1.xpose.msra.mxu0 0.0
    %402 = vmatprep.subr.mxu0 0.0
    %403 = vmatpush1.xpose.msra.mxu0 0.0
    %404 = vmatprep.subr.mxu0 0.0
    %405 = vmatpush1.xpose.msra.mxu0 0.0
    %406 = vmatprep.subr.mxu0 0.0
    %407 = vmatpush1.xpose.msra.mxu0 0.0
    %408 = vmatprep.subr.mxu0 0.0
    %409 = vmatpush1.xpose.msra.mxu0 0.0
    %410 = vmatprep.subr.mxu0 0.0
    %411 = vmatpush1.xpose.msra.mxu0 0.0
    %412 = vmatprep.subr.mxu0 0.0
    %413 = vmatpush1.xpose.msra.mxu0 0.0
    %414 = vmatprep.subr.mxu0 0.0
    %415 = vmatpush1.xpose.msra.mxu0 0.0
    %416 = vmatprep.subr.mxu0 0.0
    %417 = vmatpush1.xpose.msra.mxu0 0.0
    %418 = vmatprep.subr.mxu0 0.0
    %419 = vmatpush1.xpose.msra.mxu0 0.0
    %420 = vmatprep.subr.mxu0 0.0
    %421 = vmatpush1.xpose.msra.mxu0 0.0
    %422 = vmatprep.subr.mxu0 0.0
    %423 = vmatpush1.xpose.msra.mxu0 0.0
    %424 = vmatprep.subr.mxu0 0.0
    %425 = vmatpush1.xpose.msra.mxu0 0.0
    %426 = vmatprep.subr.mxu0 0.0
    %427 = vmatpush1.xpose.msra.mxu0 0.0
    %428 = vmatprep.subr.mxu0 0.0
    %429 = vmatpush1.xpose.msra.mxu0 0.0
    %430 = vmatprep.subr.mxu0 0.0
    %431 = vmatpush1.xpose.msra.mxu0 0.0
    %432 = vmatprep.subr.mxu0 0.0
    %433 = vmatpush1.xpose.msra.mxu0 0.0
    %434 = vmatprep.subr.mxu0 0.0
    %435 = vmatpush1.xpose.msra.mxu0 0.0
    %436 = vmatprep.subr.mxu0 0.0
    %437 = vmatpush1.xpose.msra.mxu0 0.0
    %438 = vmatprep.subr.mxu0 0.0
    %439 = vmatpush1.xpose.msra.mxu0 0.0
    %440 = vmatprep.subr.mxu0 0.0
    %441 = vmatpush1.xpose.msra.mxu0 0.0
    %442 = vmatprep.mubr.f32.mxu0 %v375
    %443 = vmatmul.mubr.f32.gmra.mrb[0].mxu0 %v368
    %v444 = vpop.f32.mrb[0].mxu0
    %v445 = vadd.f32 0.0, %v444
    %v446 = vpop.f32.mrb[0].mxu0
    %447 = vdwg.mxu0
    %v448 = vadd.f32 %v350, %v445
    %449 = vst.msk [vmem:[%s349] sm:$0x3] %vm265, %v448
    %s450 = scalar_lea.vmem [#allocation3], 2
    %v451 = vld [vmem:[%s450] sm:$0x3]
    %v452 = vmul.f32 %v346, %v346
    %v453 = vmul.f32 %v348, %v348
    %v456 = vcombine.low %v452, %v453
    %v458 = vunpack.c.l.s4 1966171168
    %v459 = vunpack.c.0.s8 %v458
    %v460 = vlaneseq
    %v461 = vshrl.u32 %v460, 7
    %v462 = vsub.s32 %v459, %v461
    %v463 = vrot.slane %v456, %v462
    %v464 = vcombine.high %v463, %v463
    %v466 = vunpack.c.l.s4 1966171168
    %v467 = vunpack.c.0.s8 %v466
    %v468 = vlaneseq
    %v469 = vshrl.u32 %v468, 7
    %v470 = vsub.s32 %v467, %v469
    %v471 = vrot.slane %v463, %v470
    %v473 = vunpack.c.l.s4 1966171168
    %v474 = vunpack.c.0.s8 %v473
    %v475 = vlaneseq
    %v476 = vshrl.u32 %v475, 7
    %v477 = vsub.s32 %v474, %v476
    %v478 = vrot.slane %v464, %v477
    %v481 = vsel %vm297, %v471, 0.0
    %v482 = vsel %vm297, %v478, 0.0
    %v483 = vadd.f32 %v481, %v482
    %484 = vadd.xlane.f32.xlu0 %v483
    %v485 = vpop.xlane.xlu0 %484
    %v486 = vadd.f32 %v451, %v485
    %487 = vst.msk [vmem:[%s450] sm:$0x3] %vm304, %v486
    %v488 = vsub.f32 %v346, %v29
    %v489 = vsub.f32 %v348, %v31
    %s490 = scalar_lea.vmem [#allocation4], 2
    %v491 = vld [vmem:[%s490] sm:$0x3]
    %v492 = vmul.f32 %v488, %v488
    %v493 = vmul.f32 %v489, %v489
    %v496 = vcombine.low %v492, %v493
    %v498 = vunpack.c.l.s4 1966171168
    %v499 = vunpack.c.0.s8 %v498
    %v500 = vlaneseq
    %v501 = vshrl.u32 %v500, 7
    %v502 = vsub.s32 %v499, %v501
    %v503 = vrot.slane %v496, %v502
    %v504 = vcombine.high %v503, %v503
    %v506 = vunpack.c.l.s4 1966171168
    %v507 = vunpack.c.0.s8 %v506
    %v508 = vlaneseq
    %v509 = vshrl.u32 %v508, 7
    %v510 = vsub.s32 %v507, %v509
    %v511 = vrot.slane %v503, %v510
    %v513 = vunpack.c.l.s4 1966171168
    %v514 = vunpack.c.0.s8 %v513
    %v515 = vlaneseq
    %v516 = vshrl.u32 %v515, 7
    %v517 = vsub.s32 %v514, %v516
    %v518 = vrot.slane %v504, %v517
    %v521 = vsel %vm297, %v511, 0.0
    %v522 = vsel %vm297, %v518, 0.0
    %v523 = vadd.f32 %v521, %v522
    %524 = vadd.xlane.f32.xlu0 %v523
    %v525 = vpop.xlane.xlu0 %524
    %v526 = vadd.f32 %v491, %v525
    %527 = vst.msk [vmem:[%s490] sm:$0x3] %vm304, %v526
    // Predicated region
    $region18: #{_lipschitz_forward.1} parent=1 // pred_check
      %p528 = pneg %p15
    $region19: #{_lipschitz_forward.1} parent=1 // pred_check_branch
      %530 = sbr.rel (%p528) target = $region21
    $region20: #{_lipschitz_forward.1} parent=1 // pred_region
      %v531 = vld [vmem:[%s2] sm:$0x1]
      %v532 = vld [vmem:[%s1] sm:$0x1]
      %v533 = vld [vmem:[%s1 + $0x4] sm:$0x1]
      %v534 = vmul.f32 %v532, %v532
      %v535 = vmul.f32 %v533, %v533
      %v538 = vrot.slane %v535, 7
      %vm539 = vcmask 1041409
      %v540 = vsel %vm539, %v538, %v534
      %vm542 = vcmask 254976
      %v543 = vsel %vm542, %v540, 0.0
      %544 = vadd.xlane.f32.xlu0 %v543
      %v545 = vpop.xlane.xlu0 %544
      %v546 = vrsqrt.pop %v545
      %v548 = vrot.slane %v546, 1
      %v551 = vmul.f32 %v532, %v546
      %v552 = vmul.f32 %v533, %v548
      %v553 = vld [vmem:[#allocation5] sm:$0x1]
      %v554 = vlaneseq
      %v555 = vshrl.u32 %v554, 7
      %v556 = vlaneseq
      %v557 = vand.u32 %v556, 127
      %vm558 = vcmp.eq.s32.totalorder %v555, %v557
      %vm559 = vcmp.ne.s32.totalorder %v555, %v557
      %v560 = vsel %vm559, 1, 0
      %v561 = vcvt.s32.f32 %v560
      %v562 = vld [vmem:[%s1 + $0x1] sm:$0x1]
      %v563 = vld [vmem:[%s1 + $0x5] sm:$0x1]
      %v564 = vmul.f32 %v562, %v562
      %v565 = vmul.f32 %v563, %v563
      %v568 = vrot.slane %v565, 7
      %v569 = vsel %vm539, %v568, %v564
      %v571 = vsel %vm542, %v569, 0.0
      %572 = vadd.xlane.f32.xlu0 %v571
      %v573 = vpop.xlane.xlu0 %572
      %v574 = vrsqrt.pop %v573
      %v576 = vrot.slane %v574, 1
      %v579 = vmul.f32 %v562, %v574
      %v580 = vmul.f32 %v563, %v576
      %v583 = vrot.slane %v580, 7
      %v584 = vsel %vm539, %v583, %v579
      %v587 = vrot.slane %v552, 7
      %v588 = vsel %vm539, %v587, %v551
      %vm589 = vcmask 261120
      %v590 = vsel %vm589, %v584, 0
      %v592 = vsel %vm589, %v588, 0
      %594 = vmatprep.subr.mxu0 0.0
      %595 = vmatpush1.xpose.msra.mxu0 %v592
      %596 = vmatprep.subr.mxu0 0.0
      %597 = vmatpush1.xpose.msra.mxu0 0.0
      %598 = vmatprep.subr.mxu0 0.0
      %599 = vmatpush1.xpose.msra.mxu0 0.0
      %600 = vmatprep.subr.mxu0 0.0
      %601 = vmatpush1.xpose.msra.mxu0 0.0
      %602 = vmatprep.subr.mxu0 0.0
      %603 = vmatpush1.xpose.msra.mxu0 0.0
      %604 = vmatprep.subr.mxu0 0.0
      %605 = vmatpush1.xpose.msra.mxu0 0.0
      %606 = vmatprep.subr.mxu0 0.0
      %607 = vmatpush1.xpose.msra.mxu0 0.0
      %608 = vmatprep.subr.mxu0 0.0
      %609 = vmatpush1.xpose.msra.mxu0 0.0
      %610 = vmatprep.subr.mxu0 0.0
      %611 = vmatpush1.xpose.msra.mxu0 0.0
      %612 = vmatprep.subr.mxu0 0.0
      %613 = vmatpush1.xpose.msra.mxu0 0.0
      %614 = vmatprep.subr.mxu0 0.0
      %615 = vmatpush1.xpose.msra.mxu0 0.0
      %616 = vmatprep.subr.mxu0 0.0
      %617 = vmatpush1.xpose.msra.mxu0 0.0
      %618 = vmatprep.subr.mxu0 0.0
      %619 = vmatpush1.xpose.msra.mxu0 0.0
      %620 = vmatprep.subr.mxu0 0.0
      %621 = vmatpush1.xpose.msra.mxu0 0.0
      %622 = vmatprep.subr.mxu0 0.0
      %623 = vmatpush1.xpose.msra.mxu0 0.0
      %624 = vmatprep.subr.mxu0 0.0
      %625 = vmatpush1.xpose.msra.mxu0 0.0
      %626 = vmatprep.subr.mxu0 0.0
      %627 = vmatpush1.xpose.msra.mxu0 0.0
      %628 = vmatprep.subr.mxu0 0.0
      %629 = vmatpush1.xpose.msra.mxu0 0.0
      %630 = vmatprep.subr.mxu0 0.0
      %631 = vmatpush1.xpose.msra.mxu0 0.0
      %632 = vmatprep.subr.mxu0 0.0
      %633 = vmatpush1.xpose.msra.mxu0 0.0
      %634 = vmatprep.subr.mxu0 0.0
      %635 = vmatpush1.xpose.msra.mxu0 0.0
      %636 = vmatprep.subr.mxu0 0.0
      %637 = vmatpush1.xpose.msra.mxu0 0.0
      %638 = vmatprep.subr.mxu0 0.0
      %639 = vmatpush1.xpose.msra.mxu0 0.0
      %640 = vmatprep.subr.mxu0 0.0
      %641 = vmatpush1.xpose.msra.mxu0 0.0
      %642 = vmatprep.subr.mxu0 0.0
      %643 = vmatpush1.xpose.msra.mxu0 0.0
      %644 = vmatprep.subr.mxu0 0.0
      %645 = vmatpush1.xpose.msra.mxu0 0.0
      %646 = vmatprep.subr.mxu0 0.0
      %647 = vmatpush1.xpose.msra.mxu0 0.0
      %648 = vmatprep.subr.mxu0 0.0
      %649 = vmatpush1.xpose.msra.mxu0 0.0
      %650 = vmatprep.subr.mxu0 0.0
      %651 = vmatpush1.xpose.msra.mxu0 0.0
      %652 = vmatprep.subr.mxu0 0.0
      %653 = vmatpush1.xpose.msra.mxu0 0.0
      %654 = vmatprep.subr.mxu0 0.0
      %655 = vmatpush1.xpose.msra.mxu0 0.0
      %656 = vmatprep.subr.mxu0 0.0
      %657 = vmatpush1.xpose.msra.mxu0 0.0
      %658 = vmatprep.mubr.f32.mxu0 0.0
      %659 = vmatmul.mubr.f32.gmra.mrb[0].mxu0 %v590
      %v660 = vpop.f32.mrb[0].mxu0
      %v661 = vadd.f32 0.0, %v660
      %v662 = vpop.f32.mrb[0].mxu0
      %663 = vdwg.mxu0
      %v664 = vld [vmem:[#allocation3] sm:$0x3]
      %v665 = vld [vmem:[#allocation4] sm:$0x3]
      %v666 = vld [vmem:[#allocation2] sm:$0x3]
      %vm667 = vcmp.eq.f32.partialorder %v665, 0.0
      %v668 = vsel %vm558, %v661, 0.0
      %v669 = vsel %vm265, %v668, 0.0
      %670 = vadd.xlane.f32.xlu0 %v669
      %v671 = vpop.xlane.xlu0 %670
      %v672 = vmax.f32 %v665, 1e-24
      %v673 = vrsqrt.pop %v672
      %v674 = vsub.f32 1.0, %v671
      %v675 = vmul.f32 %v674, %v673
      %v676 = vsub.f32 %v675, 0.01
      %v677 = vmax.f32 %v676, 0.0
      %v678 = vsel %vm667, 0.0, %v677
      %v679 = vsel %vm304, %v678, 0.0
      %680 = vadd.xlane.f32.xlu0 %v679
      %v681 = vpop.xlane.xlu0 %680
      %v682 = vrot.slane %v681, 4
      %v683 = vadd.f32 %v681, %v682
      %v684 = vrot.slane %v683, 2
      %v685 = vadd.f32 %v683, %v684
      %v686 = vrot.slane %v685, 1
      %v687 = vadd.f32 %v685, %v686
      %s688 = vtos %v687
      %s689 = sadd.f32 %s688, 0.0
      %691 = vset.pattern.permute.xlu0 0
      %692 = vperm.xlu0 %691, %v664
      %v693 = vpop.permute.xlu0 %692
      %v696 = vlaneseq
      %v697 = vshrl.u32 %v696, 7
      %v698 = vsub.s32 0, %v697
      %v699 = vrot.slane %v553, %v698
      %v701 = vadd.f32 %v693, %v699
      %v702 = vmul.f32 %v666, 2.0
      %v703 = vsub.f32 %v701, %v702
      %v704 = vmax.f32 %v703, 1e-24
      %v705 = vrsqrt.pop %v704
      %v706 = vsub.f32 1.0, %v661
      %v707 = vmul.f32 %v706, %v705
      %v708 = vsub.f32 %v707, 0.01
      %v709 = vmax.f32 %v708, 0.0
      %v710 = vmul.f32 %v709, %v561
      %v712 = vlaneseq
      %v713 = vshrl.u32 %v712, 7
      %v714 = vsub.s32 0, %v713
      %v715 = vrot.slane %v531, %v714
      %v717 = vmul.f32 %v710, %v715
      %v718 = vsel %vm265, %v717, 0.0
      %719 = vadd.xlane.f32.xlu0 %v718
      %v720 = vpop.xlane.xlu0 %719
      %v721 = vsel %vm667, 0.0, %v720
      %v722 = vsel %vm304, %v721, 0.0
      %723 = vadd.xlane.f32.xlu0 %v722
      %v724 = vpop.xlane.xlu0 %723
      %v725 = vrot.slane %v724, 4
      %v726 = vadd.f32 %v724, %v725
      %v727 = vrot.slane %v726, 2
      %v728 = vadd.f32 %v726, %v727
      %v729 = vrot.slane %v728, 1
      %v730 = vadd.f32 %v728, %v729
      %s731 = vtos %v730
      %s732 = sadd.f32 %s731, 0.0
      %v733 = vld [vmem:[%s1 + $0x2] sm:$0x1]
      %v734 = vld [vmem:[%s1 + $0x6] sm:$0x1]
      %v735 = vmul.f32 %v733, %v733
      %v736 = vmul.f32 %v734, %v734
      %v739 = vrot.slane %v736, 7
      %v740 = vsel %vm539, %v739, %v735
      %v742 = vsel %vm542, %v740, 0.0
      %743 = vadd.xlane.f32.xlu0 %v742
      %v744 = vpop.xlane.xlu0 %743
      %v745 = vrsqrt.pop %v744
      %v747 = vrot.slane %v745, 1
      %v750 = vmul.f32 %v733, %v745
      %v751 = vmul.f32 %v734, %v747
      %v754 = vrot.slane %v751, 7
      %v755 = vsel %vm539, %v754, %v750
      %v756 = vsel %vm589, %v755, 0
      %758 = vmatprep.subr.mxu0 0.0
      %759 = vmatpush1.xpose.msra.mxu0 %v592
      %760 = vmatprep.subr.mxu0 0.0
      %761 = vmatpush1.xpose.msra.mxu0 0.0
      %762 = vmatprep.subr.mxu0 0.0
      %763 = vmatpush1.xpose.msra.mxu0 0.0
      %764 = vmatprep.subr.mxu0 0.0
      %765 = vmatpush1.xpose.msra.mxu0 0.0
      %766 = vmatprep.subr.mxu0 0.0
      %767 = vmatpush1.xpose.msra.mxu0 0.0
      %768 = vmatprep.subr.mxu0 0.0
      %769 = vmatpush1.xpose.msra.mxu0 0.0
      %770 = vmatprep.subr.mxu0 0.0
      %771 = vmatpush1.xpose.msra.mxu0 0.0
      %772 = vmatprep.subr.mxu0 0.0
      %773 = vmatpush1.xpose.msra.mxu0 0.0
      %774 = vmatprep.subr.mxu0 0.0
      %775 = vmatpush1.xpose.msra.mxu0 0.0
      %776 = vmatprep.subr.mxu0 0.0
      %777 = vmatpush1.xpose.msra.mxu0 0.0
      %778 = vmatprep.subr.mxu0 0.0
      %779 = vmatpush1.xpose.msra.mxu0 0.0
      %780 = vmatprep.subr.mxu0 0.0
      %781 = vmatpush1.xpose.msra.mxu0 0.0
      %782 = vmatprep.subr.mxu0 0.0
      %783 = vmatpush1.xpose.msra.mxu0 0.0
      %784 = vmatprep.subr.mxu0 0.0
      %785 = vmatpush1.xpose.msra.mxu0 0.0
      %786 = vmatprep.subr.mxu0 0.0
      %787 = vmatpush1.xpose.msra.mxu0 0.0
      %788 = vmatprep.subr.mxu0 0.0
      %789 = vmatpush1.xpose.msra.mxu0 0.0
      %790 = vmatprep.subr.mxu0 0.0
      %791 = vmatpush1.xpose.msra.mxu0 0.0
      %792 = vmatprep.subr.mxu0 0.0
      %793 = vmatpush1.xpose.msra.mxu0 0.0
      %794 = vmatprep.subr.mxu0 0.0
      %795 = vmatpush1.xpose.msra.mxu0 0.0
      %796 = vmatprep.subr.mxu0 0.0
      %797 = vmatpush1.xpose.msra.mxu0 0.0
      %798 = vmatprep.subr.mxu0 0.0
      %799 = vmatpush1.xpose.msra.mxu0 0.0
      %800 = vmatprep.subr.mxu0 0.0
      %801 = vmatpush1.xpose.msra.mxu0 0.0
      %802 = vmatprep.subr.mxu0 0.0
      %803 = vmatpush1.xpose.msra.mxu0 0.0
      %804 = vmatprep.subr.mxu0 0.0
      %805 = vmatpush1.xpose.msra.mxu0 0.0
      %806 = vmatprep.subr.mxu0 0.0
      %807 = vmatpush1.xpose.msra.mxu0 0.0
      %808 = vmatprep.subr.mxu0 0.0
      %809 = vmatpush1.xpose.msra.mxu0 0.0
      %810 = vmatprep.subr.mxu0 0.0
      %811 = vmatpush1.xpose.msra.mxu0 0.0
      %812 = vmatprep.subr.mxu0 0.0
      %813 = vmatpush1.xpose.msra.mxu0 0.0
      %814 = vmatprep.subr.mxu0 0.0
      %815 = vmatpush1.xpose.msra.mxu0 0.0
      %816 = vmatprep.subr.mxu0 0.0
      %817 = vmatpush1.xpose.msra.mxu0 0.0
      %818 = vmatprep.subr.mxu0 0.0
      %819 = vmatpush1.xpose.msra.mxu0 0.0
      %820 = vmatprep.subr.mxu0 0.0
      %821 = vmatpush1.xpose.msra.mxu0 0.0
      %822 = vmatprep.mubr.f32.mxu0 0.0
      %823 = vmatmul.mubr.f32.gmra.mrb[0].mxu0 %v756
      %v824 = vpop.f32.mrb[0].mxu0
      %v825 = vadd.f32 0.0, %v824
      %v826 = vpop.f32.mrb[0].mxu0
      %827 = vdwg.mxu0
      %v828 = vld [vmem:[%s450] sm:$0x3]
      %v829 = vld [vmem:[%s490] sm:$0x3]
      %v830 = vld [vmem:[%s349] sm:$0x3]
      %vm831 = vcmp.eq.f32.partialorder %v829, 0.0
      %v832 = vsel %vm558, %v825, 0.0
      %v833 = vsel %vm265, %v832, 0.0
      %834 = vadd.xlane.f32.xlu0 %v833
      %v835 = vpop.xlane.xlu0 %834
      %v836 = vmax.f32 %v829, 1e-24
      %v837 = vrsqrt.pop %v836
      %v838 = vsub.f32 1.0, %v835
      %v839 = vmul.f32 %v838, %v837
      %v840 = vsub.f32 %v839, 0.01
      %v841 = vmax.f32 %v840, 0.0
      %v842 = vsel %vm831, 0.0, %v841
      %v843 = vsel %vm304, %v842, 0.0
      %844 = vadd.xlane.f32.xlu0 %v843
      %v845 = vpop.xlane.xlu0 %844
      %v846 = vrot.slane %v845, 4
      %v847 = vadd.f32 %v845, %v846
      %v848 = vrot.slane %v847, 2
      %v849 = vadd.f32 %v847, %v848
      %v850 = vrot.slane %v849, 1
      %v851 = vadd.f32 %v849, %v850
      %s852 = vtos %v851
      %s853 = sadd.f32 %s689, %s852
      %855 = vset.pattern.permute.xlu0 0
      %856 = vperm.xlu0 %855, %v828
      %v857 = vpop.permute.xlu0 %856
      %v859 = vadd.f32 %v857, %v699
      %v860 = vmul.f32 %v830, 2.0
      %v861 = vsub.f32 %v859, %v860
      %v862 = vmax.f32 %v861, 1e-24
      %v863 = vrsqrt.pop %v862
      %v864 = vsub.f32 1.0, %v825
      %v865 = vmul.f32 %v864, %v863
      %v866 = vsub.f32 %v865, 0.01
      %v867 = vmax.f32 %v866, 0.0
      %v868 = vmul.f32 %v867, %v561
      %v869 = vmul.f32 %v868, %v715
      %v870 = vsel %vm265, %v869, 0.0
      %871 = vadd.xlane.f32.xlu0 %v870
      %v872 = vpop.xlane.xlu0 %871
      %v873 = vsel %vm831, 0.0, %v872
      %v874 = vsel %vm304, %v873, 0.0
      %875 = vadd.xlane.f32.xlu0 %v874
      %v876 = vpop.xlane.xlu0 %875
      %v877 = vrot.slane %v876, 4
      %v878 = vadd.f32 %v876, %v877
      %v879 = vrot.slane %v878, 2
      %v880 = vadd.f32 %v878, %v879
      %v881 = vrot.slane %v880, 1
      %v882 = vadd.f32 %v880, %v881
      %s883 = vtos %v882
      %s884 = sadd.f32 %s732, %s883
      %s885 = smul.f32 %s853, 0.25
      %s886 = scalar_lea.smem [#allocation6], 0
      %887 = sst [smem:[%s886]] %s885
      %s888 = ssub.f32 0.0, %s884
      %s889 = smul.f32 %s888, 0.25
      %s890 = scalar_lea.smem [#allocation6], 1
      %891 = sst [smem:[%s890]] %s889
    $region21: #{_lipschitz_forward.1} parent=1 // pred_fallthru
      _
    // Predicated region
    $region22: #{_lipschitz_forward.1} parent=1 // pred_check
      _
    $region23: #{_lipschitz_forward.1} parent=1 // pred_check_branch
      %893 = sbr.rel (0) target = $region25
    $region24: #{_lipschitz_forward.1} parent=1 // pred_region
      %s895 = ssub.s32 16, 16
      %896 = vsyncadd [#allocation7], %s895
      %s898 = sshll.u32 %s3, 4
      %s899 = int_to_ptr.vmem [resolvable:$true] %s898
      %901 = dma.smem_to_vmem [#allocation6], 16, %s899, [#allocation7]
    $region25: #{_lipschitz_forward.1} parent=1 // pred_fallthru
      _
    // Predicated region
    $region26: #{_lipschitz_forward.1} parent=1 // pred_check
      _
    $region27: #{_lipschitz_forward.1} parent=1 // pred_check_branch
      %903 = sbr.rel (0) target = $region29
    $region28: #{_lipschitz_forward.1} parent=1 // pred_region
      %904 = dma.done [#allocation7], 16
    $region29: #{_lipschitz_forward.1} parent=1 // pred_fallthru
      _
    %905 = sfence
    %906 = vsyncpa [#allocation7], 1

</llo_original>
